<compile_context>
chip_gen: v6e
topology: v6e:2x2x1
jax: 0.10.0
libtpu: 0.0.40
codegen_flags: <defaults>
</compile_context>

<pallas_src>
import jax
import jax.numpy as jnp
from jax.experimental import pallas as pl
from jax.experimental.pallas import tpu as pltpu

I_SIZE = 2
O_SIZE = 10
O_PAD_SUB = 16       # output features padded to a sublane multiple (8 for f32)
NEG_INF = -1e30      # padded bias rows -> exp underflows to exactly 0 in f32


def _round_up(n, m):
    return ((n + m - 1) // m) * m


def mlp_kernel(x_ref, w_ref, b_ref, o_ref):
    # x_ref: (I_SIZE, TB)      -- batch on the lane axis
    # w_ref: (O_PAD_SUB, I_SIZE), b_ref: (O_PAD_SUB, 1)
    # o_ref: (O_PAD_SUB, TB)   -- lane-dense output slab
    x = x_ref[...]
    w = w_ref[...]
    # K=2 contraction as a VPU broadcast multiply-add (an MXU pass would be wasted
    # on a 2-deep contraction and add result-FIFO latency).
    logits = (w[:, 0:1] * x[0:1, :]
              + w[:, 1:2] * x[1:2, :]
              + b_ref[...])                               # (O_PAD_SUB, TB)
    # Numerically-stable softmax over the (16-sublane) feature axis.
    m = jnp.max(logits, axis=0, keepdims=True)            # (1, TB)
    e = jnp.exp(logits - m)                               # padded rows: exp(-1e30-m)==0
    denom = jnp.sum(e, axis=0, keepdims=True)             # (1, TB)
    # Exact divide: rows must sum to 1 to full f32 precision (kernel is HBM-bound,
    # so the VALU divide is not on the critical path).
    o_ref[...] = (e / denom).astype(o_ref.dtype)


def prepare_params(weight, bias):
    """Pre-layout PyTorch params once (outside the hot path).

    weight: (O_SIZE, I_SIZE) PyTorch nn.Linear layout; bias: (O_SIZE,).
    Returns a sublane-padded (O_PAD_SUB, I_SIZE) weight and (O_PAD_SUB, 1) bias; padded
    bias rows are -1e30 so they contribute exactly 0 to the softmax denominator.
    """
    w_p = jnp.zeros((O_PAD_SUB, I_SIZE), jnp.float32).at[:O_SIZE, :].set(weight)
    b_p = jnp.full((O_PAD_SUB, 1), NEG_INF, jnp.float32).at[:O_SIZE, 0].set(bias)
    return w_p, b_p


def mlp_forward(x, w_padded, b_padded, *, block_b=16384):
    """x: (B, I_SIZE) f32; w_padded: (O_PAD_SUB, I_SIZE); b_padded: (O_PAD_SUB, 1).

    Returns softmax(x @ W.T + b) with shape (B, O_SIZE).
    """
    B = x.shape[0]
    xT = x.T                                               # (I_SIZE, B) -- batch on lanes

    # Batch-lane tile: multiple of 128 lanes, capped at block_b; aim for >=2 grid steps
    # when B is large enough so v7x's two TensorCores both get work.
    half = _round_up(pl.cdiv(B, 2), 128)
    tb = max(128, min(block_b, half))
    b_pad = _round_up(B, tb)
    if b_pad != B:
        xT = jnp.pad(xT, ((0, 0), (0, b_pad - B)))         # padded cols computed, discarded

    grid = (b_pad // tb,)
    cost = pl.CostEstimate(
        flops=8 * O_PAD_SUB * b_pad,
        transcendentals=O_PAD_SUB * b_pad,
        bytes_accessed=4 * (I_SIZE * b_pad + O_PAD_SUB * b_pad
                            + O_PAD_SUB * I_SIZE + O_PAD_SUB),
    )

    out = pl.pallas_call(
        mlp_kernel,
        out_shape=jax.ShapeDtypeStruct((O_PAD_SUB, b_pad), jnp.float32),
        grid_spec=pl.GridSpec(
            grid=grid,
            in_specs=[
                pl.BlockSpec((I_SIZE, tb), lambda i: (0, i)),        # x: tiled over batch lanes
                pl.BlockSpec((O_PAD_SUB, I_SIZE), lambda i: (0, 0)),  # weight: resident
                pl.BlockSpec((O_PAD_SUB, 1), lambda i: (0, 0)),       # bias: resident
            ],
            out_specs=pl.BlockSpec((O_PAD_SUB, tb), lambda i: (0, i)),
        ),
        compiler_params=pltpu.CompilerParams(
            # Batch tiles are independent -> shard across both TensorCores on v7x.
            dimension_semantics=("parallel",),
        ),
        cost_estimate=cost,
    )(xT, w_padded, b_padded)

    # Drop padded feature rows / batch columns and return PyTorch layout (B, O_SIZE).
    # Kept inside the same jit as the pallas_call so XLA fuses it.
    return out[:O_SIZE, :B].T


if __name__ == "__main__":
    key = jax.random.PRNGKey(0)
    k_x, k_w, k_b = jax.random.split(key, 3)

    batch = 8
    # Deterministic synthetic parameters matching nn.Linear(i_size=2, o_size=10):
    #   weight: (o_size, i_size), bias: (o_size,).
    bound = 1.0 / (I_SIZE ** 0.5)
    weight = jax.random.uniform(k_w, (O_SIZE, I_SIZE), jnp.float32, -bound, bound)
    bias = jax.random.uniform(k_b, (O_SIZE,), jnp.float32, -bound, bound)

    x = jax.random.normal(k_x, (batch, I_SIZE), jnp.float32)

    # Pre-layout params once (not per call).
    w_p, b_p = prepare_params(weight, bias)

    # Jit the whole forward so the trailing slice/transpose fuses with the kernel output.
    fwd = jax.jit(mlp_forward)
    out = jax.block_until_ready(fwd(x, w_p, b_p))

    # Reference check in plain JAX (nn.Softmax() on 2-D input == softmax over dim=1).
    ref = jax.nn.softmax(x @ weight.T + bias, axis=1)
    assert out.shape == (batch, O_SIZE)
    assert jnp.allclose(out, ref, atol=1e-4, rtol=1e-4), "mismatch vs reference"
    assert jnp.allclose(jnp.sum(out, axis=1), 1.0, atol=1e-4), "softmax rows must sum to 1"

    print("KERNEL_OK")
</pallas_src>

<mosaic_0001>
module attributes {stable_mosaic.version = 11 : i64} {
  func.func @mlp_kernel(%arg0: i32, %arg1: memref<2x128xf32, #tpu.memory_space<vmem>>, %arg2: memref<16x2xf32, #tpu.memory_space<vmem>>, %arg3: memref<16x1xf32, #tpu.memory_space<vmem>>, %arg4: memref<16x128xf32, #tpu.memory_space<vmem>>) attributes {dimension_semantics = [#tpu.dimension_semantics<parallel>], iteration_bounds = array<i64: 1>, scalar_prefetch = 0 : i64, scratch_operands = 0 : i64, tpu.core_type = #tpu.core_type<tc>, window_params = [{transform_indices = @transform_0, window_bounds = array<i64: 2, 128>}, {pipeline_mode = #tpu.pipeline_mode<synchronous>, transform_indices = @transform_1, window_bounds = array<i64: 16, 2>}, {pipeline_mode = #tpu.pipeline_mode<synchronous>, transform_indices = @transform_2, window_bounds = array<i64: 16, 1>}, {transform_indices = @transform_3, window_bounds = array<i64: 16, 128>}]} {
    %c0 = arith.constant 0 : index
    %c0_0 = arith.constant 0 : index
    %0 = vector.load %arg1[%c0, %c0_0] : memref<2x128xf32, #tpu.memory_space<vmem>>, vector<2x128xf32>
    %c0_1 = arith.constant 0 : index
    %c0_2 = arith.constant 0 : index
    %1 = vector.load %arg2[%c0_1, %c0_2] : memref<16x2xf32, #tpu.memory_space<vmem>>, vector<16x2xf32>
    %2 = vector.extract_strided_slice %1 {offsets = [0, 0], sizes = [16, 1], strides = [1, 1]} : vector<16x2xf32> to vector<16x1xf32>
    %3 = vector.extract_strided_slice %0 {offsets = [0, 0], sizes = [1, 128], strides = [1, 1]} : vector<2x128xf32> to vector<1x128xf32>
    %4 = vector.broadcast %2 : vector<16x1xf32> to vector<16x128xf32>
    %5 = vector.broadcast %3 : vector<1x128xf32> to vector<16x128xf32>
    %6 = arith.mulf %4, %5 : vector<16x128xf32>
    %7 = vector.extract_strided_slice %1 {offsets = [0, 1], sizes = [16, 1], strides = [1, 1]} : vector<16x2xf32> to vector<16x1xf32>
    %8 = vector.extract_strided_slice %0 {offsets = [1, 0], sizes = [1, 128], strides = [1, 1]} : vector<2x128xf32> to vector<1x128xf32>
    %9 = vector.broadcast %7 : vector<16x1xf32> to vector<16x128xf32>
    %10 = vector.broadcast %8 : vector<1x128xf32> to vector<16x128xf32>
    %11 = arith.mulf %9, %10 : vector<16x128xf32>
    %12 = arith.addf %6, %11 : vector<16x128xf32>
    %c0_3 = arith.constant 0 : index
    %c0_4 = arith.constant 0 : index
    %13 = vector.load %arg3[%c0_3, %c0_4] : memref<16x1xf32, #tpu.memory_space<vmem>>, vector<16x1xf32>
    %14 = vector.broadcast %13 : vector<16x1xf32> to vector<16x128xf32>
    %15 = arith.addf %12, %14 : vector<16x128xf32>
    %cst = arith.constant dense<0xFF800000> : vector<128xf32>
    %16 = vector.multi_reduction <maximumf>, %15, %cst [0] : vector<16x128xf32> to vector<128xf32>
    %17 = vector.shape_cast %16 : vector<128xf32> to vector<1x128xf32>
    %18 = vector.broadcast %17 : vector<1x128xf32> to vector<16x128xf32>
    %19 = arith.subf %15, %18 : vector<16x128xf32>
    %20 = math.exp %19 : vector<16x128xf32>
    %cst_5 = arith.constant dense<0.000000e+00> : vector<128xf32>
    %21 = vector.multi_reduction <add>, %20, %cst_5 [0] : vector<16x128xf32> to vector<128xf32>
    %22 = vector.shape_cast %21 : vector<128xf32> to vector<1x128xf32>
    %23 = vector.broadcast %22 : vector<1x128xf32> to vector<16x128xf32>
    %24 = arith.divf %20, %23 : vector<16x128xf32>
    %c0_6 = arith.constant 0 : index
    %c0_7 = arith.constant 0 : index
    %25 = vector.load %arg4[%c0_6, %c0_7] : memref<16x128xf32, #tpu.memory_space<vmem>>, vector<16x128xf32>
    tpu.vector_store %arg4[%c0_6, %c0_7], %24 {strides = array<i32>} : memref<16x128xf32, #tpu.memory_space<vmem>>, vector<16x128xf32>,
    return
  }
  func.func @transform_0(%arg0: i32) -> (i32, i32) {
    %c0_i32 = arith.constant 0 : i32
    %c0_i32_0 = arith.constant 0 : i32
    return %c0_i32, %arg0 : i32, i32
  }
  func.func @transform_1(%arg0: i32) -> (i32, i32) {
    %c0_i32 = arith.constant 0 : i32
    %c0_i32_0 = arith.constant 0 : i32
    %c0_i32_1 = arith.constant 0 : i32
    return %c0_i32, %c0_i32_0 : i32, i32
  }
  func.func @transform_2(%arg0: i32) -> (i32, i32) {
    %c0_i32 = arith.constant 0 : i32
    %c0_i32_0 = arith.constant 0 : i32
    %c0_i32_1 = arith.constant 0 : i32
    return %c0_i32, %c0_i32_0 : i32, i32
  }
  func.func @transform_3(%arg0: i32) -> (i32, i32) {
    %c0_i32 = arith.constant 0 : i32
    %c0_i32_0 = arith.constant 0 : i32
    return %c0_i32, %arg0 : i32, i32
  }
}

</mosaic_0001>

<llo_original>
// kernel: mlp_forward.1
$region0: #{mlp_forward.1}
  #allocation0 [shape = 'u32[]', space=smem, size = 0x4, offset = 0x4, fixed_abs, tag = 'smem constant byte address 0x4 - core index']
  #allocation1 [shape = 'u32[144,128]{1,0:T(1,128)}', space=vmem, size = 0x12000, scoped, tag = 'internal scratch']
  %s0 = inlined_call_operand.vmem [shape: f32[2,128], index: 0, kind: input, shape index: {}]
  %s1 = inlined_call_operand.vmem [shape: f32[16,2], index: 1, kind: input, shape index: {}]
  %s2 = inlined_call_operand.vmem [shape: f32[16,1], index: 2, kind: input, shape index: {}]
  %s3 = inlined_call_operand.vmem [shape: f32[16,128], index: 3, kind: output, shape index: {}]
  %s4 = sld [smem:[#allocation0]]
  $region22: #{mlp_forward.1} parent=0
    _
  %s6 = ssub.s32 1, %s4
  %s7 = scalar_select 0, %s6, %s4
  // Predicated region
  $region2: #{mlp_forward.1} parent=0 // pred_check
    _
  $region3: #{mlp_forward.1} parent=0 // pred_check_branch
    %9 = sbr.rel (0) target = $region5
  $region4: #{mlp_forward.1} parent=0 // pred_region
    _
  $region5: #{mlp_forward.1} parent=0 // pred_fallthru
    _
  // Predicated region
  $region6: #{mlp_forward.1} parent=0 // pred_check
    _
  $region7: #{mlp_forward.1} parent=0 // pred_check_branch
    %11 = sbr.rel (0) target = $region9
  $region8: #{mlp_forward.1} parent=0 // pred_region
    _
  $region9: #{mlp_forward.1} parent=0 // pred_fallthru
    _
  // Predicated region
  $region10: #{mlp_forward.1} parent=0 // pred_check
    _
  $region11: #{mlp_forward.1} parent=0 // pred_check_branch
    %13 = sbr.rel (0) target = $region13
  $region12: #{mlp_forward.1} parent=0 // pred_region
    _
  $region13: #{mlp_forward.1} parent=0 // pred_fallthru
    _
  %v14 = vld [vmem:[%s0] sm:$0x3]
  %v15 = vld [vmem:[%s1] sm:$0xff]
  %v16 = vld [vmem:[%s1 + $0x8] sm:$0xff]
  %18 = vset.pattern.permute.xlu0 0
  %19 = vperm.xlu0 %18, %v15
  %v20 = vpop.permute.xlu0 %19
  %23 = vset.pattern.permute.xlu0 0
  %24 = vperm.xlu0 %23, %v16
  %v25 = vpop.permute.xlu0 %24
  %v27 = vlaneseq
  %v28 = vshrl.u32 %v27, 7
  %v29 = vsub.s32 0, %v28
  %v30 = vrot.slane %v14, %v29
  %v31 = vmul.f32 %v20, %v30
  %v32 = vmul.f32 %v25, %v30
  %33 = vset.pattern.permute.xlu0 1
  %34 = vperm.xlu0 %33, %v15
  %v35 = vpop.permute.xlu0 %34
  %37 = vset.pattern.permute.xlu0 1
  %38 = vperm.xlu0 %37, %v16
  %v39 = vpop.permute.xlu0 %38
  %v41 = vlaneseq
  %v42 = vshrl.u32 %v41, 7
  %v43 = vsub.s32 1, %v42
  %v44 = vrot.slane %v14, %v43
  %v45 = vmul.f32 %v35, %v44
  %v46 = vmul.f32 %v39, %v44
  %v47 = vadd.f32 %v31, %v45
  %v48 = vadd.f32 %v32, %v46
  %v49 = vld [vmem:[%s2] sm:$0xff]
  %v50 = vld [vmem:[%s2 + $0x8] sm:$0xff]
  %52 = vset.pattern.permute.xlu0 0
  %53 = vperm.xlu0 %52, %v49
  %v54 = vpop.permute.xlu0 %53
  %57 = vset.pattern.permute.xlu0 0
  %58 = vperm.xlu0 %57, %v50
  %v59 = vpop.permute.xlu0 %58
  %v61 = vadd.f32 %v47, %v54
  %v62 = vadd.f32 %v48, %v59
  %v63 = vmax.f32 %v61, %v62
  %v64 = vrot.slane %v63, 4
  %v65 = vmax.f32 %v63, %v64
  %v66 = vrot.slane %v65, 2
  %v67 = vmax.f32 %v65, %v66
  %v68 = vrot.slane %v67, 1
  %v69 = vmax.f32 %v67, %v68
  %v70 = vsub.f32 %v61, %v69
  %v71 = vsub.f32 %v62, %v69
  %v72 = vmul.f32 %v70, 1.442695
  %v73 = vpow.pop %v72
  %v74 = vmul.f32 %v71, 1.442695
  %v75 = vpow.pop %v74
  %v76 = vadd.f32 %v73, %v75
  %v77 = vrot.slane %v76, 4
  %v78 = vadd.f32 %v76, %v77
  %v79 = vrot.slane %v78, 2
  %v80 = vadd.f32 %v78, %v79
  %v81 = vrot.slane %v80, 1
  %v82 = vadd.f32 %v80, %v81
  %v83 = vrcp.pop %v82
  %v84 = vmul.f32 %v73, %v83
  %v85 = vmul.f32 %v75, %v83
  %86 = vst [vmem:[%s3] sm:$0xff] %v84
  %87 = vst [vmem:[%s3 + $0x8] sm:$0xff] %v85
  // Predicated region
  $region14: #{mlp_forward.1} parent=0 // pred_check
    _
  $region15: #{mlp_forward.1} parent=0 // pred_check_branch
    %89 = sbr.rel (0) target = $region17
  $region16: #{mlp_forward.1} parent=0 // pred_region
    _
  $region17: #{mlp_forward.1} parent=0 // pred_fallthru
    _
  // Predicated region
  $region18: #{mlp_forward.1} parent=0 // pred_check
    _
  $region19: #{mlp_forward.1} parent=0 // pred_check_branch
    %91 = sbr.rel (0) target = $region21
  $region20: #{mlp_forward.1} parent=0 // pred_region
    _
  $region21: #{mlp_forward.1} parent=0 // pred_fallthru
    _

</llo_original>
